<compile_context>
chip_gen: v7x
topology: tpu7x:2x2x1
jax: 0.10.0
libtpu: 0.0.40
codegen_flags: <defaults>
</compile_context>

<pallas_src>
import jax
import jax.numpy as jnp
from jax.experimental import pallas as pl
from jax.experimental.pallas import tpu as pltpu

_LANE = 128
_VMEM_LIMIT_BYTES = 48 * 1024 * 1024      # safe on v5e/v6e (128 MiB) and v7x (64 MiB)
_PREPARED_KEY = "w3row"


def _round_up(x, m):
    return (x + m - 1) // m * m


def _choose_tile_b(batch, tile_b_max):
    """Pick a batch tile: big (amortize per-step overhead), low padding waste,
    lane/MXU friendly (multiple of 128), and >= 2 tiles for B >= 512 (v7x)."""
    if batch < 512:
        return _round_up(batch, 8)            # single step, minimal padding
    num_tiles = max(2, pl.cdiv(batch, tile_b_max))
    tile = _round_up(pl.cdiv(batch, num_tiles), 128)
    return min(tile, _round_up(tile_b_max, 128))


def _mlp_kernel(x_ref, w1_ref, b1_ref, w2_ref, b2_ref, w3_ref, b3_ref, o_ref):
    # In-kernel cast of the streamed X tile (f32 in HBM -> compute dtype).
    x = x_ref[...].astype(w1_ref.dtype)

    # Layer 1 (MXU): [TILE_B, F] @ [F, H1], f32 accumulation.
    h = jnp.dot(x, w1_ref[...], preferred_element_type=jnp.float32)
    h = jnp.maximum(h + b1_ref[...], 0.0)               # bias + ReLU (VPU, f32)

    # Layer 2 (MXU).
    h = jnp.dot(h.astype(w2_ref.dtype), w2_ref[...],
                preferred_element_type=jnp.float32)
    h = jnp.maximum(h + b2_ref[...], 0.0)

    # Output head (out_features=1) on the MXU as w3_row @ h^T so the result
    # comes out lane-major ([1, TILE_B]) -> unmasked full-width stores.
    y = jax.lax.dot_general(
        w3_ref[...], h,                                   # f32 x f32
        dimension_numbers=(((1,), (1,)), ((), ())),
        preferred_element_type=jnp.float32)
    y = y + b3_ref[...]                                   # [1, TILE_B]
    o_ref[...] = y.reshape(o_ref.shape).astype(o_ref.dtype)


def prepare_params(params, compute_dtype=jnp.bfloat16):
    """One-time weight prep: pad hidden dims 100->128 (exact through ReLU),
    cast matmul weights to the compute dtype, keep biases/head in f32."""
    w1, b1, w2, b2, w3, b3 = (params["w1"], params["b1"], params["w2"],
                              params["b2"], params["w3"], params["b3"])
    H1, H2 = w1.shape[1], w2.shape[1]
    Hp1, Hp2 = _round_up(H1, _LANE), _round_up(H2, _LANE)
    return {
        "w1p": jnp.pad(w1, ((0, 0), (0, Hp1 - H1))).astype(compute_dtype),
        "b1p": jnp.pad(b1, ((0, 0), (0, Hp1 - H1))).astype(jnp.float32),
        "w2p": jnp.pad(w2, ((0, Hp1 - H1), (0, Hp2 - H2))).astype(compute_dtype),
        "b2p": jnp.pad(b2, ((0, 0), (0, Hp2 - H2))).astype(jnp.float32),
        # Head stored as a lane row [1, Hp2] in f32 (accuracy; MXU has slack).
        _PREPARED_KEY: jnp.pad(w3.T, ((0, 0), (0, Hp2 - H2))).astype(jnp.float32),
        "b3p": b3.reshape(1, 1).astype(jnp.float32),
    }


def ps6_regressor_forward(x, params, *, compute_dtype=jnp.bfloat16,
                          tile_b_max=4096):
    """x: [B, n_input_features].  params: raw ([in,out] weights) or prepared."""
    if _PREPARED_KEY not in params:
        params = prepare_params(params, compute_dtype)
    w1p, b1p = params["w1p"], params["b1p"]
    w2p, b2p = params["w2p"], params["b2p"]
    w3row, b3p = params[_PREPARED_KEY], params["b3p"]

    B, F = x.shape
    Hp1 = w1p.shape[1]
    Hp2 = w2p.shape[1]

    # --- batch tiling: large tiles, minimal padding, X streamed as-is -------
    tile_b = _choose_tile_b(B, tile_b_max)
    B_pad = _round_up(B, tile_b)
    xp = x if B_pad == B else jnp.pad(x, ((0, B_pad - B), (0, 0)))
    num_tiles = B_pad // tile_b
    grid = (num_tiles,)

    flops = 2 * B_pad * (F * Hp1 + Hp1 * Hp2 + Hp2)
    bytes_accessed = (
        xp.size * xp.dtype.itemsize
        + w1p.size * w1p.dtype.itemsize
        + w2p.size * w2p.dtype.itemsize
        + 4 * (b1p.size + b2p.size + w3row.size + b3p.size)
        + 4 * B_pad)

    out = pl.pallas_call(
        _mlp_kernel,
        out_shape=jax.ShapeDtypeStruct((num_tiles, 1, tile_b), jnp.float32),
        grid=grid,
        in_specs=[
            # X tile: pipelined (double-buffered) over the batch grid.
            pl.BlockSpec((tile_b, F), lambda i: (i, 0)),
            # Weights / biases: constant block index -> resident in VMEM.
            pl.BlockSpec((F, Hp1),   lambda i: (0, 0)),
            pl.BlockSpec((1, Hp1),   lambda i: (0, 0)),
            pl.BlockSpec((Hp1, Hp2), lambda i: (0, 0)),
            pl.BlockSpec((1, Hp2),   lambda i: (0, 0)),
            pl.BlockSpec((1, Hp2),   lambda i: (0, 0)),
            pl.BlockSpec((1, 1),     lambda i: (0, 0)),
        ],
        # Lane-dense output row per grid step (unmasked vst's).
        out_specs=pl.BlockSpec((1, 1, tile_b), lambda i: (i, 0, 0)),
        compiler_params=pltpu.CompilerParams(
            dimension_semantics=("parallel",),        # v7x: split batch on 2 TCs
            vmem_limit_bytes=_VMEM_LIMIT_BYTES),
        cost_estimate=pl.CostEstimate(
            flops=flops, transcendentals=0, bytes_accessed=bytes_accessed),
    )(xp, w1p, b1p, w2p, b2p, w3row, b3p)

    return out.reshape(-1)[:B].reshape(B, 1)


def init_params(key, n_input_features, dense_layer_sizes=(100, 100)):
    """Deterministic init mimicking torch.nn.Linear default (U(-1/sqrt(fan_in), +))."""
    sizes = [n_input_features] + list(dense_layer_sizes) + [1]
    params = {}
    keys = jax.random.split(key, 2 * (len(sizes) - 1))
    for i in range(len(sizes) - 1):
        fan_in, fan_out = sizes[i], sizes[i + 1]
        bound = 1.0 / jnp.sqrt(fan_in)
        # stored already transposed: [in, out]
        w = jax.random.uniform(keys[2 * i], (fan_in, fan_out),
                               minval=-bound, maxval=bound, dtype=jnp.float32)
        b = jax.random.uniform(keys[2 * i + 1], (1, fan_out),
                               minval=-bound, maxval=bound, dtype=jnp.float32)
        tag = str(i + 1)
        params["w" + tag] = w
        params["b" + tag] = b
    return params


def _reference_forward(x, params):
    h = jnp.maximum(x @ params["w1"] + params["b1"], 0.0)
    h = jnp.maximum(h @ params["w2"] + params["b2"], 0.0)
    return h @ params["w3"] + params["b3"]


if __name__ == "__main__":
    key = jax.random.PRNGKey(0)
    k_x, k_p = jax.random.split(key)

    batch = 8
    n_input_features = 32
    dense_layer_sizes = (100, 100)

    x = jax.random.normal(k_x, (batch, n_input_features), dtype=jnp.float32)
    params = init_params(k_p, n_input_features, dense_layer_sizes)
    y_ref = _reference_forward(x, params)

    fwd = jax.jit(ps6_regressor_forward)

    # f32 compute path: exact check against the pure-JAX reference.
    prep_f32 = prepare_params(params, compute_dtype=jnp.float32)
    y_f32 = jax.block_until_ready(fwd(x, prep_f32))
    assert y_f32.shape == (batch, 1)
    assert jnp.allclose(y_f32, y_ref, atol=1e-5, rtol=1e-5)

    # Default fast path: bf16 matmuls with f32 accumulation (v5e/v6e/v7x MXU).
    prep_bf16 = prepare_params(params)
    y_bf16 = jax.block_until_ready(fwd(x, prep_bf16))
    assert y_bf16.shape == (batch, 1)
    assert jnp.allclose(y_bf16, y_ref, atol=5e-2, rtol=5e-2)

    print("KERNEL_OK")
</pallas_src>

<mosaic_0001>
module attributes {stable_mosaic.version = 11 : i64} {
  func.func @_mlp_kernel(%arg0: i32, %arg1: memref<8x32xf32, #tpu.memory_space<vmem>>, %arg2: memref<32x128xf32, #tpu.memory_space<vmem>>, %arg3: memref<1x128xf32, #tpu.memory_space<vmem>>, %arg4: memref<128x128xf32, #tpu.memory_space<vmem>>, %arg5: memref<1x128xf32, #tpu.memory_space<vmem>>, %arg6: memref<1x128xf32, #tpu.memory_space<vmem>>, %arg7: memref<1x1xf32, #tpu.memory_space<vmem>>, %arg8: memref<1x1x8xf32, #tpu.memory_space<vmem>>) attributes {dimension_semantics = [#tpu.dimension_semantics<parallel>], iteration_bounds = array<i64: 1>, scalar_prefetch = 0 : i64, scratch_operands = 0 : i64, tpu.core_type = #tpu.core_type<tc>, window_params = [{transform_indices = @transform_0, window_bounds = array<i64: 8, 32>}, {pipeline_mode = #tpu.pipeline_mode<synchronous>, transform_indices = @transform_1, window_bounds = array<i64: 32, 128>}, {pipeline_mode = #tpu.pipeline_mode<synchronous>, transform_indices = @transform_2, window_bounds = array<i64: 1, 128>}, {pipeline_mode = #tpu.pipeline_mode<synchronous>, transform_indices = @transform_3, window_bounds = array<i64: 128, 128>}, {pipeline_mode = #tpu.pipeline_mode<synchronous>, transform_indices = @transform_4, window_bounds = array<i64: 1, 128>}, {pipeline_mode = #tpu.pipeline_mode<synchronous>, transform_indices = @transform_5, window_bounds = array<i64: 1, 128>}, {pipeline_mode = #tpu.pipeline_mode<synchronous>, transform_indices = @transform_6, window_bounds = array<i64: 1, 1>}, {transform_indices = @transform_7, window_bounds = array<i64: 1, 1, 8>}]} {
    %c0 = arith.constant 0 : index
    %c0_0 = arith.constant 0 : index
    %0 = vector.load %arg1[%c0, %c0_0] : memref<8x32xf32, #tpu.memory_space<vmem>>, vector<8x32xf32>
    %c0_1 = arith.constant 0 : index
    %c0_2 = arith.constant 0 : index
    %1 = vector.load %arg2[%c0_1, %c0_2] : memref<32x128xf32, #tpu.memory_space<vmem>>, vector<32x128xf32>
    %cst = arith.constant dense<0.000000e+00> : vector<8x128xf32>
    %2 = tpu.matmul %0, %1, %cst {dimension_numbers = #tpu.dot_dimension_numbers<[1], [0], [0], [1], [0, 0, 1, 1], [], []>} : vector<8x32xf32>, vector<32x128xf32>, vector<8x128xf32> -> vector<8x128xf32>
    %c0_3 = arith.constant 0 : index
    %c0_4 = arith.constant 0 : index
    %3 = vector.load %arg3[%c0_3, %c0_4] : memref<1x128xf32, #tpu.memory_space<vmem>>, vector<1x128xf32>
    %4 = vector.broadcast %3 : vector<1x128xf32> to vector<8x128xf32>
    %5 = arith.addf %2, %4 : vector<8x128xf32>
    %cst_5 = arith.constant 0.000000e+00 : f32
    %6 = vector.broadcast %cst_5 : f32 to vector<8x128xf32>
    %7 = arith.maximumf %5, %6 : vector<8x128xf32>
    %c0_6 = arith.constant 0 : index
    %c0_7 = arith.constant 0 : index
    %8 = vector.load %arg4[%c0_6, %c0_7] : memref<128x128xf32, #tpu.memory_space<vmem>>, vector<128x128xf32>
    %cst_8 = arith.constant dense<0.000000e+00> : vector<8x128xf32>
    %9 = tpu.matmul %7, %8, %cst_8 {dimension_numbers = #tpu.dot_dimension_numbers<[1], [0], [0], [1], [0, 0, 1, 1], [], []>} : vector<8x128xf32>, vector<128x128xf32>, vector<8x128xf32> -> vector<8x128xf32>
    %c0_9 = arith.constant 0 : index
    %c0_10 = arith.constant 0 : index
    %10 = vector.load %arg5[%c0_9, %c0_10] : memref<1x128xf32, #tpu.memory_space<vmem>>, vector<1x128xf32>
    %11 = vector.broadcast %10 : vector<1x128xf32> to vector<8x128xf32>
    %12 = arith.addf %9, %11 : vector<8x128xf32>
    %cst_11 = arith.constant 0.000000e+00 : f32
    %13 = vector.broadcast %cst_11 : f32 to vector<8x128xf32>
    %14 = arith.maximumf %12, %13 : vector<8x128xf32>
    %c0_12 = arith.constant 0 : index
    %c0_13 = arith.constant 0 : index
    %15 = vector.load %arg6[%c0_12, %c0_13] : memref<1x128xf32, #tpu.memory_space<vmem>>, vector<1x128xf32>
    %cst_14 = arith.constant dense<0.000000e+00> : vector<1x8xf32>
    %16 = tpu.matmul %15, %14, %cst_14 {dimension_numbers = #tpu.dot_dimension_numbers<[1], [1], [0], [0], [0, 0, 1, 0], [], []>} : vector<1x128xf32>, vector<8x128xf32>, vector<1x8xf32> -> vector<1x8xf32>
    %c0_15 = arith.constant 0 : index
    %c0_16 = arith.constant 0 : index
    %17 = vector.load %arg7[%c0_15, %c0_16] : memref<1x1xf32, #tpu.memory_space<vmem>>, vector<1x1xf32>
    %18 = vector.broadcast %17 : vector<1x1xf32> to vector<1x8xf32>
    %19 = arith.addf %16, %18 : vector<1x8xf32>
    %20 = vector.shape_cast %19 : vector<1x8xf32> to vector<1x1x8xf32>
    %c0_17 = arith.constant 0 : index
    %c0_18 = arith.constant 0 : index
    %c0_19 = arith.constant 0 : index
    %21 = vector.load %arg8[%c0_17, %c0_18, %c0_19] : memref<1x1x8xf32, #tpu.memory_space<vmem>>, vector<1x1x8xf32>
    tpu.vector_store %arg8[%c0_17, %c0_18, %c0_19], %20 {strides = array<i32>} : memref<1x1x8xf32, #tpu.memory_space<vmem>>, vector<1x1x8xf32>,
    return
  }
  func.func @transform_0(%arg0: i32) -> (i32, i32) {
    %c0_i32 = arith.constant 0 : i32
    %c0_i32_0 = arith.constant 0 : i32
    return %arg0, %c0_i32 : i32, i32
  }
  func.func @transform_1(%arg0: i32) -> (i32, i32) {
    %c0_i32 = arith.constant 0 : i32
    %c0_i32_0 = arith.constant 0 : i32
    %c0_i32_1 = arith.constant 0 : i32
    return %c0_i32, %c0_i32_0 : i32, i32
  }
  func.func @transform_2(%arg0: i32) -> (i32, i32) {
    %c0_i32 = arith.constant 0 : i32
    %c0_i32_0 = arith.constant 0 : i32
    %c0_i32_1 = arith.constant 0 : i32
    return %c0_i32, %c0_i32_0 : i32, i32
  }
  func.func @transform_3(%arg0: i32) -> (i32, i32) {
    %c0_i32 = arith.constant 0 : i32
    %c0_i32_0 = arith.constant 0 : i32
    %c0_i32_1 = arith.constant 0 : i32
    return %c0_i32, %c0_i32_0 : i32, i32
  }
  func.func @transform_4(%arg0: i32) -> (i32, i32) {
    %c0_i32 = arith.constant 0 : i32
    %c0_i32_0 = arith.constant 0 : i32
    %c0_i32_1 = arith.constant 0 : i32
    return %c0_i32, %c0_i32_0 : i32, i32
  }
  func.func @transform_5(%arg0: i32) -> (i32, i32) {
    %c0_i32 = arith.constant 0 : i32
    %c0_i32_0 = arith.constant 0 : i32
    %c0_i32_1 = arith.constant 0 : i32
    return %c0_i32, %c0_i32_0 : i32, i32
  }
  func.func @transform_6(%arg0: i32) -> (i32, i32) {
    %c0_i32 = arith.constant 0 : i32
    %c0_i32_0 = arith.constant 0 : i32
    %c0_i32_1 = arith.constant 0 : i32
    return %c0_i32, %c0_i32_0 : i32, i32
  }
  func.func @transform_7(%arg0: i32) -> (i32, i32, i32) {
    %c0_i32 = arith.constant 0 : i32
    %c0_i32_0 = arith.constant 0 : i32
    %c0_i32_1 = arith.constant 0 : i32
    return %arg0, %c0_i32, %c0_i32_0 : i32, i32, i32
  }
}

</mosaic_0001>

<llo_original>
// kernel: ps6_regressor_forward.1
$region0: #{ps6_regressor_forward.1}
  #allocation0 [shape = 'u32[]', space=smem, size = 0x4, offset = 0x4, fixed_abs, tag = 'smem constant byte address 0x4 - core index']
  #allocation1 [shape = 'u32[144,128]{1,0:T(1,128)}', space=vmem, size = 0x12000, scoped, tag = 'internal scratch']
  #allocation2 [shape = 'f32[1,1]{1,0:T(1,128)S(1)}', space=vmem, size = 0x200, scoped, tag = 'scoped memory for ps6_regressor_forward.1']
  %s0 = inlined_call_operand.hbm [shape: f32[8,32], index: 0, kind: input, shape index: {}]
  %s1 = inlined_call_operand.hbm [shape: f32[32,128], index: 1, kind: input, shape index: {}]
  %s2 = inlined_call_operand.vmem [shape: f32[1,128], index: 2, kind: input, shape index: {}]
  %s3 = inlined_call_operand.hbm [shape: f32[128,128], index: 3, kind: input, shape index: {}]
  %s4 = inlined_call_operand.vmem [shape: f32[1,128], index: 4, kind: input, shape index: {}]
  %s5 = inlined_call_operand.vmem [shape: f32[1,128], index: 5, kind: input, shape index: {}]
  %s6 = inlined_call_operand.<no memory space> [shape: f32[1,1], index: 6, kind: input, shape index: {}]
  %s7 = inlined_call_operand.hbm [shape: f32[1,1,8], index: 7, kind: output, shape index: {}]
  %s8 = sld [smem:[#allocation0]]
  $region50: #{ps6_regressor_forward.1} parent=0
    _
  %s10 = ssub.s32 1, %s8
  %s11 = scalar_select 0, %s10, %s8
  %v12 = vstv %s6
  %13 = vst [vmem:[#allocation2] sm:$0x1] %v12
  $region1: #{ps6_regressor_forward.1} parent=0
    #allocation3 [shape = 'u8[4096]{0}', space=vmem, size = 0x1000, scoped, tag = 'input window, operand 0, single buffered']
    #allocation4 [shape = 's32[1]{0}', space=sflag, size = 0x4, scoped, tag = 'scoped memory for ps6_regressor_forward.1']
    #allocation5 [shape = 's32[1]{0}', space=sflag, size = 0x4, scoped, tag = 'scoped memory for ps6_regressor_forward.1']
    #allocation6 [shape = 'u8[16384]{0}', space=vmem, size = 0x4000, scoped, tag = 'input window, operand 1, single buffered']
    #allocation7 [shape = 's32[1]{0}', space=sflag, size = 0x4, scoped, tag = 'scoped memory for ps6_regressor_forward.1']
    #allocation8 [shape = 'u8[65536]{0}', space=vmem, size = 0x10000, scoped, tag = 'input window, operand 3, single buffered']
    #allocation9 [shape = 'u8[512]{0}', space=vmem, size = 0x400, scoped, tag = 'output window, operand 0, single buffered']
    %14 = vsyncpa [#allocation4], 0
    %15 = vsyncpa [#allocation7], 0
    %16 = vsyncpa [#allocation5], 0
    // Predicated region
    $region2: #{ps6_regressor_forward.1} parent=1 // pred_check
      _
    $region3: #{ps6_regressor_forward.1} parent=1 // pred_check_branch
      %18 = sbr.rel (0) target = $region5
    $region4: #{ps6_regressor_forward.1} parent=1 // pred_region
      %s20 = ssub.s32 128, 128
      %21 = vsyncadd [#allocation4], %s20
      %s23 = sshll.u32 [#allocation3], 4
      %s24 = int_to_ptr.vmem [resolvable:$true] %s23
      %26 = dma.hbm_to_vmem [thread:$0]  %s0, 128, %s24, [#allocation4]
    $region5: #{ps6_regressor_forward.1} parent=1 // pred_fallthru
      _
    // Predicated region
    $region6: #{ps6_regressor_forward.1} parent=1 // pred_check
      _
    $region7: #{ps6_regressor_forward.1} parent=1 // pred_check_branch
      %28 = sbr.rel (0) target = $region9
    $region8: #{ps6_regressor_forward.1} parent=1 // pred_region
      %s30 = ssub.s32 512, 512
      %31 = vsyncadd [#allocation7], %s30
      %s32 = sshll.u32 [#allocation6], 4
      %s33 = int_to_ptr.vmem [resolvable:$true] %s32
      %38 = dma.hbm_to_vmem [thread:$0]  %s1, 512, %s33, [#allocation7], 128, 128, 8
    $region9: #{ps6_regressor_forward.1} parent=1 // pred_fallthru
      _
    // Predicated region
    $region10: #{ps6_regressor_forward.1} parent=1 // pred_check
      _
    $region11: #{ps6_regressor_forward.1} parent=1 // pred_check_branch
      %40 = sbr.rel (0) target = $region13
    $region12: #{ps6_regressor_forward.1} parent=1 // pred_region
      _
    $region13: #{ps6_regressor_forward.1} parent=1 // pred_fallthru
      _
    // Predicated region
    $region14: #{ps6_regressor_forward.1} parent=1 // pred_check
      _
    $region15: #{ps6_regressor_forward.1} parent=1 // pred_check_branch
      %42 = sbr.rel (0) target = $region17
    $region16: #{ps6_regressor_forward.1} parent=1 // pred_region
      %s44 = ssub.s32 2048, 2048
      %45 = vsyncadd [#allocation7], %s44
      %s46 = sshll.u32 [#allocation8], 4
      %s47 = int_to_ptr.vmem [resolvable:$true] %s46
      %52 = dma.hbm_to_vmem [thread:$0]  %s3, 2048, %s47, [#allocation7], 128, 128, 8
    $region17: #{ps6_regressor_forward.1} parent=1 // pred_fallthru
      _
    // Predicated region
    $region18: #{ps6_regressor_forward.1} parent=1 // pred_check
      _
    $region19: #{ps6_regressor_forward.1} parent=1 // pred_check_branch
      %54 = sbr.rel (0) target = $region21
    $region20: #{ps6_regressor_forward.1} parent=1 // pred_region
      _
    $region21: #{ps6_regressor_forward.1} parent=1 // pred_fallthru
      _
    // Predicated region
    $region22: #{ps6_regressor_forward.1} parent=1 // pred_check
      _
    $region23: #{ps6_regressor_forward.1} parent=1 // pred_check_branch
      %56 = sbr.rel (0) target = $region25
    $region24: #{ps6_regressor_forward.1} parent=1 // pred_region
      _
    $region25: #{ps6_regressor_forward.1} parent=1 // pred_fallthru
      _
    // Predicated region
    $region26: #{ps6_regressor_forward.1} parent=1 // pred_check
      _
    $region27: #{ps6_regressor_forward.1} parent=1 // pred_check_branch
      %58 = sbr.rel (0) target = $region29
    $region28: #{ps6_regressor_forward.1} parent=1 // pred_region
      _
    $region29: #{ps6_regressor_forward.1} parent=1 // pred_fallthru
      _
    // Predicated region
    $region30: #{ps6_regressor_forward.1} parent=1 // pred_check
      _
    $region31: #{ps6_regressor_forward.1} parent=1 // pred_check_branch
      %60 = sbr.rel (0) target = $region33
    $region32: #{ps6_regressor_forward.1} parent=1 // pred_region
      %61 = dma.done [#allocation4], 128
    $region33: #{ps6_regressor_forward.1} parent=1 // pred_fallthru
      _
    // Predicated region
    $region34: #{ps6_regressor_forward.1} parent=1 // pred_check
      _
    $region35: #{ps6_regressor_forward.1} parent=1 // pred_check_branch
      %63 = sbr.rel (0) target = $region37
    $region36: #{ps6_regressor_forward.1} parent=1 // pred_region
      %64 = dma.done [#allocation7], 512
    $region37: #{ps6_regressor_forward.1} parent=1 // pred_fallthru
      _
    // Predicated region
    $region38: #{ps6_regressor_forward.1} parent=1 // pred_check
      _
    $region39: #{ps6_regressor_forward.1} parent=1 // pred_check_branch
      %66 = sbr.rel (0) target = $region41
    $region40: #{ps6_regressor_forward.1} parent=1 // pred_region
      %67 = dma.done [#allocation7], 2048
    $region41: #{ps6_regressor_forward.1} parent=1 // pred_fallthru
      _
    %v68 = vld [vmem:[#allocation3] sm:$0xff]
    %v69 = vld [vmem:[#allocation6] sm:$0xff]
    %v70 = vld [vmem:[#allocation6 + $0x8] sm:$0xff]
    %v71 = vld [vmem:[#allocation6 + $0x10] sm:$0xff]
    %v72 = vld [vmem:[#allocation6 + $0x18] sm:$0xff]
    %v73 = vld [vmem:[%s2] sm:$0x1]
    %v75 = vlaneseq
    %v76 = vshrl.u32 %v75, 7
    %v77 = vsub.s32 0, %v76
    %v78 = vrot.slane %v73, %v77
    %vm80 = vcmask 261120
    %v82 = vsel %vm80, %v68, 0
    %84 = vmatprep.subr.mxu0 0.0
    %85 = vmatpush1.msra.mxu0 %v69
    %86 = vmatprep.subr.mxu0 0.0
    %87 = vmatpush1.msra.mxu0 %v70
    %88 = vmatprep.subr.mxu0 0.0
    %89 = vmatpush1.msra.mxu0 %v71
    %90 = vmatprep.subr.mxu0 0.0
    %91 = vmatpush1.msra.mxu0 %v72
    %92 = vmatprep.subr.mxu0 0.0
    %93 = vmatpush1.msra.mxu0 0.0
    %94 = vmatprep.subr.mxu0 0.0
    %95 = vmatpush1.msra.mxu0 0.0
    %96 = vmatprep.subr.mxu0 0.0
    %97 = vmatpush1.msra.mxu0 0.0
    %98 = vmatprep.subr.mxu0 0.0
    %99 = vmatpush1.msra.mxu0 0.0
    %100 = vmatprep.subr.mxu0 0.0
    %101 = vmatpush1.msra.mxu0 0.0
    %102 = vmatprep.subr.mxu0 0.0
    %103 = vmatpush1.msra.mxu0 0.0
    %104 = vmatprep.subr.mxu0 0.0
    %105 = vmatpush1.msra.mxu0 0.0
    %106 = vmatprep.subr.mxu0 0.0
    %107 = vmatpush1.msra.mxu0 0.0
    %108 = vmatprep.subr.mxu0 0.0
    %109 = vmatpush1.msra.mxu0 0.0
    %110 = vmatprep.subr.mxu0 0.0
    %111 = vmatpush1.msra.mxu0 0.0
    %112 = vmatprep.subr.mxu0 0.0
    %113 = vmatpush1.msra.mxu0 0.0
    %114 = vmatprep.subr.mxu0 0.0
    %115 = vmatpush1.msra.mxu0 0.0
    %116 = vmatprep.subr.mxu0 0.0
    %117 = vmatpush1.msra.mxu0 0.0
    %118 = vmatprep.subr.mxu0 0.0
    %119 = vmatpush1.msra.mxu0 0.0
    %120 = vmatprep.subr.mxu0 0.0
    %121 = vmatpush1.msra.mxu0 0.0
    %122 = vmatprep.subr.mxu0 0.0
    %123 = vmatpush1.msra.mxu0 0.0
    %124 = vmatprep.subr.mxu0 0.0
    %125 = vmatpush1.msra.mxu0 0.0
    %126 = vmatprep.subr.mxu0 0.0
    %127 = vmatpush1.msra.mxu0 0.0
    %128 = vmatprep.subr.mxu0 0.0
    %129 = vmatpush1.msra.mxu0 0.0
    %130 = vmatprep.subr.mxu0 0.0
    %131 = vmatpush1.msra.mxu0 0.0
    %132 = vmatprep.subr.mxu0 0.0
    %133 = vmatpush1.msra.mxu0 0.0
    %134 = vmatprep.subr.mxu0 0.0
    %135 = vmatpush1.msra.mxu0 0.0
    %136 = vmatprep.subr.mxu0 0.0
    %137 = vmatpush1.msra.mxu0 0.0
    %138 = vmatprep.subr.mxu0 0.0
    %139 = vmatpush1.msra.mxu0 0.0
    %140 = vmatprep.subr.mxu0 0.0
    %141 = vmatpush1.msra.mxu0 0.0
    %142 = vmatprep.subr.mxu0 0.0
    %143 = vmatpush1.msra.mxu0 0.0
    %144 = vmatprep.subr.mxu0 0.0
    %145 = vmatpush1.msra.mxu0 0.0
    %146 = vmatprep.subr.mxu0 0.0
    %147 = vmatpush1.msra.mxu0 0.0
    %148 = vmatprep.mubr.f32.mxu0 0.0
    %149 = vmatmul.mubr.f32.gmra.mrb[0].mxu0 %v82
    %v150 = vpop.f32.mrb[0].mxu0
    %v151 = vadd.f32 %v78, %v150
    %v152 = vpop.f32.mrb[0].mxu0
    %153 = vdwg.mxu0
    %v154 = vmax.f32 %v151, 0.0
    %v155 = vld [vmem:[#allocation8] sm:$0xff]
    %v156 = vld [vmem:[#allocation8 + $0x8] sm:$0xff]
    %v157 = vld [vmem:[#allocation8 + $0x10] sm:$0xff]
    %v158 = vld [vmem:[#allocation8 + $0x18] sm:$0xff]
    %v159 = vld [vmem:[#allocation8 + $0x20] sm:$0xff]
    %v160 = vld [vmem:[#allocation8 + $0x28] sm:$0xff]
    %v161 = vld [vmem:[#allocation8 + $0x30] sm:$0xff]
    %v162 = vld [vmem:[#allocation8 + $0x38] sm:$0xff]
    %v163 = vld [vmem:[#allocation8 + $0x40] sm:$0xff]
    %v164 = vld [vmem:[#allocation8 + $0x48] sm:$0xff]
    %v165 = vld [vmem:[#allocation8 + $0x50] sm:$0xff]
    %v166 = vld [vmem:[#allocation8 + $0x58] sm:$0xff]
    %v167 = vld [vmem:[#allocation8 + $0x60] sm:$0xff]
    %v168 = vld [vmem:[#allocation8 + $0x68] sm:$0xff]
    %v169 = vld [vmem:[#allocation8 + $0x70] sm:$0xff]
    %v170 = vld [vmem:[#allocation8 + $0x78] sm:$0xff]
    %v171 = vld [vmem:[%s4] sm:$0x1]
    %v173 = vlaneseq
    %v174 = vshrl.u32 %v173, 7
    %v175 = vsub.s32 0, %v174
    %v176 = vrot.slane %v171, %v175
    %178 = vmatprep.subr.mxu0 0.0
    %179 = vmatpush1.msra.mxu0 %v155
    %180 = vmatprep.subr.mxu0 0.0
    %181 = vmatpush1.msra.mxu0 %v156
    %182 = vmatprep.subr.mxu0 0.0
    %183 = vmatpush1.msra.mxu0 %v157
    %184 = vmatprep.subr.mxu0 0.0
    %185 = vmatpush1.msra.mxu0 %v158
    %186 = vmatprep.subr.mxu0 0.0
    %187 = vmatpush1.msra.mxu0 %v159
    %188 = vmatprep.subr.mxu0 0.0
    %189 = vmatpush1.msra.mxu0 %v160
    %190 = vmatprep.subr.mxu0 0.0
    %191 = vmatpush1.msra.mxu0 %v161
    %192 = vmatprep.subr.mxu0 0.0
    %193 = vmatpush1.msra.mxu0 %v162
    %194 = vmatprep.subr.mxu0 0.0
    %195 = vmatpush1.msra.mxu0 %v163
    %196 = vmatprep.subr.mxu0 0.0
    %197 = vmatpush1.msra.mxu0 %v164
    %198 = vmatprep.subr.mxu0 0.0
    %199 = vmatpush1.msra.mxu0 %v165
    %200 = vmatprep.subr.mxu0 0.0
    %201 = vmatpush1.msra.mxu0 %v166
    %202 = vmatprep.subr.mxu0 0.0
    %203 = vmatpush1.msra.mxu0 %v167
    %204 = vmatprep.subr.mxu0 0.0
    %205 = vmatpush1.msra.mxu0 %v168
    %206 = vmatprep.subr.mxu0 0.0
    %207 = vmatpush1.msra.mxu0 %v169
    %208 = vmatprep.subr.mxu0 0.0
    %209 = vmatpush1.msra.mxu0 %v170
    %210 = vmatprep.subr.mxu0 0.0
    %211 = vmatpush1.msra.mxu0 0.0
    %212 = vmatprep.subr.mxu0 0.0
    %213 = vmatpush1.msra.mxu0 0.0
    %214 = vmatprep.subr.mxu0 0.0
    %215 = vmatpush1.msra.mxu0 0.0
    %216 = vmatprep.subr.mxu0 0.0
    %217 = vmatpush1.msra.mxu0 0.0
    %218 = vmatprep.subr.mxu0 0.0
    %219 = vmatpush1.msra.mxu0 0.0
    %220 = vmatprep.subr.mxu0 0.0
    %221 = vmatpush1.msra.mxu0 0.0
    %222 = vmatprep.subr.mxu0 0.0
    %223 = vmatpush1.msra.mxu0 0.0
    %224 = vmatprep.subr.mxu0 0.0
    %225 = vmatpush1.msra.mxu0 0.0
    %226 = vmatprep.subr.mxu0 0.0
    %227 = vmatpush1.msra.mxu0 0.0
    %228 = vmatprep.subr.mxu0 0.0
    %229 = vmatpush1.msra.mxu0 0.0
    %230 = vmatprep.subr.mxu0 0.0
    %231 = vmatpush1.msra.mxu0 0.0
    %232 = vmatprep.subr.mxu0 0.0
    %233 = vmatpush1.msra.mxu0 0.0
    %234 = vmatprep.subr.mxu0 0.0
    %235 = vmatpush1.msra.mxu0 0.0
    %236 = vmatprep.subr.mxu0 0.0
    %237 = vmatpush1.msra.mxu0 0.0
    %238 = vmatprep.subr.mxu0 0.0
    %239 = vmatpush1.msra.mxu0 0.0
    %240 = vmatprep.subr.mxu0 0.0
    %241 = vmatpush1.msra.mxu0 0.0
    %242 = vmatprep.mubr.f32.mxu0 0.0
    %243 = vmatmul.mubr.f32.gmra.mrb[0].mxu0 %v154
    %v244 = vpop.f32.mrb[0].mxu0
    %v245 = vadd.f32 %v176, %v244
    %v246 = vpop.f32.mrb[0].mxu0
    %247 = vdwg.mxu0
    %v248 = vmax.f32 %v245, 0.0
    %v249 = vld [vmem:[%s5] sm:$0x1]
    %v250 = vld [vmem:[#allocation2] sm:$0x1]
    %252 = vset.pattern.permute.xlu0 0
    %253 = vperm.xlu0 %252, %v250
    %v254 = vpop.permute.xlu0 %253
    %v256 = vlaneseq
    %v257 = vshrl.u32 %v256, 7
    %v258 = vsub.s32 0, %v257
    %v259 = vrot.slane %v254, %v258
    %260 = vmatprep.subr.mxu0 0.0
    %261 = vmatpush1.xpose.msra.mxu0 %v248
    %262 = vmatprep.subr.mxu0 0.0
    %263 = vmatpush1.xpose.msra.mxu0 0.0
    %264 = vmatprep.subr.mxu0 0.0
    %265 = vmatpush1.xpose.msra.mxu0 0.0
    %266 = vmatprep.subr.mxu0 0.0
    %267 = vmatpush1.xpose.msra.mxu0 0.0
    %268 = vmatprep.subr.mxu0 0.0
    %269 = vmatpush1.xpose.msra.mxu0 0.0
    %270 = vmatprep.subr.mxu0 0.0
    %271 = vmatpush1.xpose.msra.mxu0 0.0
    %272 = vmatprep.subr.mxu0 0.0
    %273 = vmatpush1.xpose.msra.mxu0 0.0
    %274 = vmatprep.subr.mxu0 0.0
    %275 = vmatpush1.xpose.msra.mxu0 0.0
    %276 = vmatprep.subr.mxu0 0.0
    %277 = vmatpush1.xpose.msra.mxu0 0.0
    %278 = vmatprep.subr.mxu0 0.0
    %279 = vmatpush1.xpose.msra.mxu0 0.0
    %280 = vmatprep.subr.mxu0 0.0
    %281 = vmatpush1.xpose.msra.mxu0 0.0
    %282 = vmatprep.subr.mxu0 0.0
    %283 = vmatpush1.xpose.msra.mxu0 0.0
    %284 = vmatprep.subr.mxu0 0.0
    %285 = vmatpush1.xpose.msra.mxu0 0.0
    %286 = vmatprep.subr.mxu0 0.0
    %287 = vmatpush1.xpose.msra.mxu0 0.0
    %288 = vmatprep.subr.mxu0 0.0
    %289 = vmatpush1.xpose.msra.mxu0 0.0
    %290 = vmatprep.subr.mxu0 0.0
    %291 = vmatpush1.xpose.msra.mxu0 0.0
    %292 = vmatprep.subr.mxu0 0.0
    %293 = vmatpush1.xpose.msra.mxu0 0.0
    %294 = vmatprep.subr.mxu0 0.0
    %295 = vmatpush1.xpose.msra.mxu0 0.0
    %296 = vmatprep.subr.mxu0 0.0
    %297 = vmatpush1.xpose.msra.mxu0 0.0
    %298 = vmatprep.subr.mxu0 0.0
    %299 = vmatpush1.xpose.msra.mxu0 0.0
    %300 = vmatprep.subr.mxu0 0.0
    %301 = vmatpush1.xpose.msra.mxu0 0.0
    %302 = vmatprep.subr.mxu0 0.0
    %303 = vmatpush1.xpose.msra.mxu0 0.0
    %304 = vmatprep.subr.mxu0 0.0
    %305 = vmatpush1.xpose.msra.mxu0 0.0
    %306 = vmatprep.subr.mxu0 0.0
    %307 = vmatpush1.xpose.msra.mxu0 0.0
    %308 = vmatprep.subr.mxu0 0.0
    %309 = vmatpush1.xpose.msra.mxu0 0.0
    %310 = vmatprep.subr.mxu0 0.0
    %311 = vmatpush1.xpose.msra.mxu0 0.0
    %312 = vmatprep.subr.mxu0 0.0
    %313 = vmatpush1.xpose.msra.mxu0 0.0
    %314 = vmatprep.subr.mxu0 0.0
    %315 = vmatpush1.xpose.msra.mxu0 0.0
    %316 = vmatprep.subr.mxu0 0.0
    %317 = vmatpush1.xpose.msra.mxu0 0.0
    %318 = vmatprep.subr.mxu0 0.0
    %319 = vmatpush1.xpose.msra.mxu0 0.0
    %320 = vmatprep.subr.mxu0 0.0
    %321 = vmatpush1.xpose.msra.mxu0 0.0
    %322 = vmatprep.subr.mxu0 0.0
    %323 = vmatpush1.xpose.msra.mxu0 0.0
    %324 = vmatprep.mubr.f32.mxu0 0.0
    %325 = vmatmul.mubr.f32.gmra.mrb[0].mxu0 %v249
    %v326 = vpop.f32.mrb[0].mxu0
    %v327 = vadd.f32 %v259, %v326
    %v328 = vpop.f32.mrb[0].mxu0
    %329 = vdwg.mxu0
    %vm330 = vcmask 57344
    %331 = vst.msk [vmem:[#allocation9] sm:$0x1] %vm330, %v327
    // Predicated region
    $region42: #{ps6_regressor_forward.1} parent=1 // pred_check
      _
    $region43: #{ps6_regressor_forward.1} parent=1 // pred_check_branch
      %333 = sbr.rel (0) target = $region45
    $region44: #{ps6_regressor_forward.1} parent=1 // pred_region
      %s335 = ssub.s32 16, 16
      %336 = vsyncadd [#allocation5], %s335
      %s338 = sshll.u32 [#allocation9], 4
      %s339 = int_to_ptr.vmem [resolvable:$true] %s338
      %341 = dma.vmem_to_hbm [thread:$0]  %s339, 16, %s7, [#allocation5]
    $region45: #{ps6_regressor_forward.1} parent=1 // pred_fallthru
      _
    // Predicated region
    $region46: #{ps6_regressor_forward.1} parent=1 // pred_check
      _
    $region47: #{ps6_regressor_forward.1} parent=1 // pred_check_branch
      %343 = sbr.rel (0) target = $region49
    $region48: #{ps6_regressor_forward.1} parent=1 // pred_region
      %344 = dma.done [#allocation5], 16
    $region49: #{ps6_regressor_forward.1} parent=1 // pred_fallthru
      _
    %345 = vsyncpa [#allocation4], 1
    %346 = vsyncpa [#allocation7], 1
    %347 = vsyncpa [#allocation5], 1

</llo_original>
